<compile_context>
chip_gen: v5e
topology: v5e:2x2
jax: 0.10.0
libtpu: 0.0.40
codegen_flags: <defaults>
</compile_context>

<pallas_src>
import functools

import jax
import jax.numpy as jnp
from jax import lax
from jax.experimental import pallas as pl
from jax.experimental.pallas import tpu as pltpu


def _caer_kernel(text_ref, score_ref, len_ref, gt_ref, out_ref):
    """Per-batch-tile kernel in the lane-dense (TB, SDp) layout.

    text_ref  : VMEM (TB, SDp) f32  -- embedded text, one example per row (lane-padded)
    score_ref : VMEM (TB, S)   f32  -- per-position text_fc score (from (V,1) score table)
    len_ref   : VMEM (TB, 1)   i32  -- per-example text lengths
    gt_ref    : VMEM (S, SDp)  f32  -- resident 0/1 lane-broadcast selector (constant block)
    out_ref   : VMEM (TB, SDp) f32  -- output block (HBM-aliased onto the text buffer)
    """
    x = text_ref[...]                                   # (TB, SDp)
    score = score_ref[...]                              # (TB, S)
    lengths = len_ref[...]                              # (TB, 1) int32
    tb, s_len = score.shape

    # step_function: mean over the first `length` positions, 0/1 threshold mask
    # restricted to those positions, then mask * score.
    pos = lax.broadcasted_iota(jnp.int32, (tb, s_len), 1)
    valid = pos < lengths                                # (TB, S)
    denom = jnp.maximum(lengths, 1).astype(jnp.float32)  # (TB, 1)
    mean_u = jnp.sum(jnp.where(valid, score, 0.0), axis=-1, keepdims=True) / denom
    weight = jnp.where(valid & (score >= mean_u), 1.0, 0.0)
    step = weight * score                                # (TB, S)

    # Lane-broadcast step[t, s] over the D lanes of position s with one small
    # (TB,S)x(S,SDp) matmul against the resident exact 0/1 selector; the MXU is
    # otherwise idle in this HBM-bound kernel, and the output stays lane-dense.
    step_b = jnp.dot(step, gt_ref[...], preferred_element_type=jnp.float32)  # (TB, SDp)

    out_ref[...] = (x * step_b).astype(out_ref.dtype)


def caer_forward(text_indices, target_indices, embedding_matrix, fc_w, fc_b,
                 *, batch_tile=None):
    """Glue + Pallas call.

    text_indices   : (B, S)  int32
    target_indices : (B, St) int32
    embedding_matrix : (V, D) f32
    fc_w : (1, D) f32   (nn.Linear(D, 1).weight)
    fc_b : (1,)  f32    (nn.Linear(D, 1).bias)
    """
    B, S = text_indices.shape
    V, D = embedding_matrix.shape
    SD = S * D
    SDp = ((SD + 127) // 128) * 128          # lane-dense, 128-aligned output lane dim

    emb = embedding_matrix.astype(jnp.float32)
    w = fc_w.reshape(D, 1).astype(jnp.float32)
    b = fc_b.reshape(()).astype(jnp.float32)

    # Glue (XLA side): embedding gathers, lengths, and the Linear(D->1) folded
    # through the embedding table (one (V,D)x(D,1) matmul + a (B,S) gather).
    text = emb[text_indices]                                   # (B, S, D)
    orig_target_embed = emb[target_indices]                    # (B, St, D)
    text_len = jnp.sum(text_indices != 0, axis=1).astype(jnp.int32)   # (B,)
    score_table = (emb @ w + b).reshape(V)                     # (V,)
    score = score_table[text_indices]                          # (B, S) f32

    # Lane-dense 2-D layout (B, SDp); pad lanes so stores are unmasked 128-wide.
    text2d = text.reshape(B, SD)
    if SDp != SD:
        text2d = jnp.pad(text2d, ((0, 0), (0, SDp - SD)))
    len2d = text_len.reshape(B, 1)

    # Batch-tile size: multiple of 8 sublanes, ~6 MiB per input tile, clamped to the
    # (rounded) real batch so small batches are not padded up to the VMEM budget,
    # and halved if needed so the parallel grid axis has >= 2 steps (v7x has 2 TCs).
    if batch_tile is None:
        vmem_budget = 6 * 1024 * 1024
        auto_tb = max(8, (vmem_budget // (SDp * 4)) // 8 * 8)
        b_rounded = ((B + 7) // 8) * 8
        tb = min(auto_tb, b_rounded)
        if b_rounded // tb < 2 and tb > 8:
            tb = max(8, (tb // 2 // 8) * 8)
    else:
        tb = max(8, ((int(batch_tile) + 7) // 8) * 8)
    bp = ((B + tb - 1) // tb) * tb

    if bp != B:
        text2d = jnp.pad(text2d, ((0, bp - B), (0, 0)))
        score = jnp.pad(score, ((0, bp - B), (0, 0)))
        len2d = jnp.pad(len2d, ((0, bp - B), (0, 0)))

    # Resident 0/1 lane-broadcast selector: g_t[s, l] = 1 iff l // D == s and l < S*D.
    lane = jnp.arange(SDp)
    g_t = ((lane[None, :] // D == jnp.arange(S)[:, None])
           & (lane[None, :] < SD)).astype(jnp.float32)          # (S, SDp)

    grid_spec = pltpu.PrefetchScalarGridSpec(
        num_scalar_prefetch=0,
        grid=(bp // tb,),
        in_specs=[
            pl.BlockSpec((tb, SDp), lambda i: (i, 0)),   # text tile
            pl.BlockSpec((tb, S), lambda i: (i, 0)),     # per-position scores
            pl.BlockSpec((tb, 1), lambda i: (i, 0)),     # lengths
            pl.BlockSpec((S, SDp), lambda i: (0, 0)),    # broadcast selector (resident)
        ],
        out_specs=pl.BlockSpec((tb, SDp), lambda i: (i, 0)),
    )

    out2d = pl.pallas_call(
        _caer_kernel,
        out_shape=jax.ShapeDtypeStruct((bp, SDp), jnp.float32),
        grid_spec=grid_spec,
        compiler_params=pltpu.CompilerParams(
            dimension_semantics=("parallel",),
            vmem_limit_bytes=48 * 1024 * 1024,   # > v5e's 16 MiB default, < v7x's 64 MiB
        ),
        input_output_aliases={0: 0},   # reuse the embedded-text HBM buffer for the output
    )(text2d, score, len2d, g_t)

    output = out2d[:B, :SD].reshape(B, S, D)
    return output, orig_target_embed


def caer_reference(text_indices, target_indices, embedding_matrix, fc_w, fc_b):
    """Pure-JAX reference of the same forward semantics (for sanity check)."""
    text = embedding_matrix[text_indices]                          # (B, S, D)
    orig_target_embed = embedding_matrix[target_indices]
    text_len = jnp.sum(text_indices != 0, axis=1)                  # (B,)
    score = jnp.sum(text * fc_w[0], axis=-1) + fc_b[0]             # (B, S)
    pos = jnp.arange(text.shape[1])[None, :]
    valid = pos < text_len[:, None]
    mean_u = jnp.sum(jnp.where(valid, score, 0.0), axis=1) / jnp.maximum(text_len, 1)
    weight = jnp.where(valid & (score >= mean_u[:, None]), 1.0, 0.0)
    step_out = (weight * score)[..., None]                         # (B, S, 1)
    return text * step_out, orig_target_embed


if __name__ == "__main__":
    key = jax.random.PRNGKey(0)
    k_emb, k_w, k_b, k_text, k_tgt, k_len = jax.random.split(key, 6)

    # Small, module-consistent shapes.  S*D = 512 (lane-dense, 128-aligned);
    # auto tile clamps to the batch and splits into 2 parallel grid steps.
    V, D = 50, 32           # vocab size, embed_dim
    B, S, St = 16, 16, 4    # batch, text seq len, target seq len

    embedding_matrix = jax.random.normal(k_emb, (V, D), dtype=jnp.float32)
    fc_w = jax.random.normal(k_w, (1, D), dtype=jnp.float32) * 0.1   # Linear(D, 1).weight
    fc_b = jax.random.normal(k_b, (1,), dtype=jnp.float32) * 0.1     # Linear(D, 1).bias

    # text_indices with trailing zero padding (random lengths in [3, S]).
    text_indices = jax.random.randint(k_text, (B, S), 1, V, dtype=jnp.int32)
    lengths = jax.random.randint(k_len, (B,), 3, S + 1, dtype=jnp.int32)
    pad_mask = jnp.arange(S)[None, :] < lengths[:, None]
    text_indices = jnp.where(pad_mask, text_indices, 0)

    target_indices = jax.random.randint(k_tgt, (B, St), 1, V, dtype=jnp.int32)

    fwd = jax.jit(caer_forward)
    out, tgt_embed = fwd(text_indices, target_indices, embedding_matrix, fc_w, fc_b)
    out = jax.block_until_ready(out)
    tgt_embed = jax.block_until_ready(tgt_embed)

    ref_out, ref_tgt = caer_reference(text_indices, target_indices,
                                      embedding_matrix, fc_w, fc_b)
    assert out.shape == (B, S, D) and tgt_embed.shape == (B, St, D)
    assert jnp.allclose(out, ref_out, atol=1e-4, rtol=1e-4)
    assert jnp.allclose(tgt_embed, ref_tgt)

    # TODO(synk): bidirectional LSTM + text_dfc are dead code in the original forward
    # (their result is overwritten), so they are deliberately not implemented.
    print("KERNEL_OK")
</pallas_src>

<mosaic_0001>
module attributes {stable_mosaic.version = 11 : i64} {
  func.func @_caer_kernel(%arg0: i32, %arg1: memref<8x512xf32, #tpu.memory_space<vmem>>, %arg2: memref<8x16xf32, #tpu.memory_space<vmem>>, %arg3: memref<8x1xi32, #tpu.memory_space<vmem>>, %arg4: memref<16x512xf32, #tpu.memory_space<vmem>>, %arg5: memref<8x512xf32, #tpu.memory_space<vmem>>) attributes {dimension_semantics = [#tpu.dimension_semantics<parallel>], iteration_bounds = array<i64: 2>, scalar_prefetch = 0 : i64, scratch_operands = 0 : i64, tpu.core_type = #tpu.core_type<tc>, window_params = [{transform_indices = @transform_0, window_bounds = array<i64: 8, 512>}, {transform_indices = @transform_1, window_bounds = array<i64: 8, 16>}, {transform_indices = @transform_2, window_bounds = array<i64: 8, 1>}, {pipeline_mode = #tpu.pipeline_mode<synchronous>, transform_indices = @transform_3, window_bounds = array<i64: 16, 512>}, {transform_indices = @transform_4, window_bounds = array<i64: 8, 512>}]} {
    %c0 = arith.constant 0 : index
    %c0_0 = arith.constant 0 : index
    %0 = vector.load %arg1[%c0, %c0_0] : memref<8x512xf32, #tpu.memory_space<vmem>>, vector<8x512xf32>
    %c0_1 = arith.constant 0 : index
    %c0_2 = arith.constant 0 : index
    %1 = vector.load %arg2[%c0_1, %c0_2] : memref<8x16xf32, #tpu.memory_space<vmem>>, vector<8x16xf32>
    %c0_3 = arith.constant 0 : index
    %c0_4 = arith.constant 0 : index
    %2 = vector.load %arg3[%c0_3, %c0_4] : memref<8x1xi32, #tpu.memory_space<vmem>>, vector<8x1xi32>
    %3 = tpu.iota {dimensions = array<i32: 1>} : vector<8x16xi32>
    %4 = vector.broadcast %2 : vector<8x1xi32> to vector<8x16xi32>
    %5 = arith.cmpi slt, %3, %4 : vector<8x16xi32>
    %c1_i32 = arith.constant 1 : i32
    %6 = vector.broadcast %c1_i32 : i32 to vector<8x1xi32>
    %7 = arith.maxsi %2, %6 : vector<8x1xi32>
    %8 = arith.sitofp %7 : vector<8x1xi32> to vector<8x1xf32>
    %cst = arith.constant 0.000000e+00 : f32
    %9 = vector.broadcast %cst : f32 to vector<8x16xf32>
    %10 = arith.select %5, %1, %9 : vector<8x16xi1>, vector<8x16xf32>
    %cst_5 = arith.constant dense<0.000000e+00> : vector<8xf32>
    %11 = vector.multi_reduction <add>, %10, %cst_5 [1] : vector<8x16xf32> to vector<8xf32>
    %12 = vector.shape_cast %11 : vector<8xf32> to vector<8x1xf32>
    %13 = arith.divf %12, %8 : vector<8x1xf32>
    %14 = vector.broadcast %13 : vector<8x1xf32> to vector<8x16xf32>
    %15 = arith.cmpf oge, %1, %14 : vector<8x16xf32>
    %16 = arith.andi %5, %15 : vector<8x16xi1>
    %cst_6 = arith.constant 1.000000e+00 : f32
    %cst_7 = arith.constant 0.000000e+00 : f32
    %17 = vector.broadcast %cst_6 : f32 to vector<8x16xf32>
    %18 = vector.broadcast %cst_7 : f32 to vector<8x16xf32>
    %19 = arith.select %16, %17, %18 : vector<8x16xi1>, vector<8x16xf32>
    %20 = arith.mulf %19, %1 : vector<8x16xf32>
    %c0_8 = arith.constant 0 : index
    %c0_9 = arith.constant 0 : index
    %21 = vector.load %arg4[%c0_8, %c0_9] : memref<16x512xf32, #tpu.memory_space<vmem>>, vector<16x512xf32>
    %cst_10 = arith.constant dense<0.000000e+00> : vector<8x512xf32>
    %22 = tpu.matmul %20, %21, %cst_10 {dimension_numbers = #tpu.dot_dimension_numbers<[1], [0], [0], [1], [0, 0, 1, 1], [], []>} : vector<8x16xf32>, vector<16x512xf32>, vector<8x512xf32> -> vector<8x512xf32>
    %23 = arith.mulf %0, %22 : vector<8x512xf32>
    %c0_11 = arith.constant 0 : index
    %c0_12 = arith.constant 0 : index
    %24 = vector.load %arg5[%c0_11, %c0_12] : memref<8x512xf32, #tpu.memory_space<vmem>>, vector<8x512xf32>
    tpu.vector_store %arg5[%c0_11, %c0_12], %23 {strides = array<i32>} : memref<8x512xf32, #tpu.memory_space<vmem>>, vector<8x512xf32>,
    return
  }
  func.func @transform_0(%arg0: i32) -> (i32, i32) {
    %c0_i32 = arith.constant 0 : i32
    %c0_i32_0 = arith.constant 0 : i32
    return %arg0, %c0_i32 : i32, i32
  }
  func.func @transform_1(%arg0: i32) -> (i32, i32) {
    %c0_i32 = arith.constant 0 : i32
    %c0_i32_0 = arith.constant 0 : i32
    return %arg0, %c0_i32 : i32, i32
  }
  func.func @transform_2(%arg0: i32) -> (i32, i32) {
    %c0_i32 = arith.constant 0 : i32
    %c0_i32_0 = arith.constant 0 : i32
    return %arg0, %c0_i32 : i32, i32
  }
  func.func @transform_3(%arg0: i32) -> (i32, i32) {
    %c0_i32 = arith.constant 0 : i32
    %c0_i32_0 = arith.constant 0 : i32
    %c0_i32_1 = arith.constant 0 : i32
    return %c0_i32, %c0_i32_0 : i32, i32
  }
  func.func @transform_4(%arg0: i32) -> (i32, i32) {
    %c0_i32 = arith.constant 0 : i32
    %c0_i32_0 = arith.constant 0 : i32
    return %arg0, %c0_i32 : i32, i32
  }
}

</mosaic_0001>

<llo_original>
// kernel: caer_forward.1
$region0: #{caer_forward.1}
  #allocation0 [shape = 'u32[]', space=smem, size = 0x4, offset = 0x4, fixed_abs, tag = 'smem constant byte address 0x4 - core index']
  #allocation1 [shape = 'u32[72,128]{1,0:T(1,128)}', space=vmem, size = 0x9000, scoped, tag = 'internal scratch']
  %s0 = inlined_call_operand.vmem [shape: f32[16,512], index: 0, kind: input, shape index: {}, may-alias: {0,4}]
  %s1 = inlined_call_operand.vmem [shape: f32[16,16], index: 1, kind: input, shape index: {}]
  %s2 = inlined_call_operand.vmem [shape: s32[16,1], index: 2, kind: input, shape index: {}]
  %s3 = inlined_call_operand.vmem [shape: f32[16,512], index: 3, kind: input, shape index: {}]
  %s4 = inlined_call_operand.vmem [shape: f32[16,512], index: 4, kind: output, shape index: {}, may-alias: {0,4}]
  %s5 = sld [smem:[#allocation0]]
  $region49: #{caer_forward.1} parent=0
    _
  %s7 = ssub.s32 1, %s5
  %s8 = scalar_select 0, %s7, %s5
  loop: start=0, step=1, limit=4
  $region2: #{caer_forward.1} parent=0 // loop_pre_header
    _
  $region3: #{caer_forward.1} parent=0 // loop_header
    %s10 = sphi 0, %s14
    %p11 = scmp.ge.s32.totalorder %s10, 4
    %s20 = sphi 0, %s22
    %s23 = sphi 0, %s20
    %s24 = sphi 0, %s23
    %s40 = sphi 0, %s24
    %s46 = sphi 0, %s48
    %s49 = sphi 0, %s46
    %s50 = sphi 0, %s49
    %s66 = sphi 0, %s50
    %s72 = sphi 0, %s74
    %s75 = sphi 0, %s72
    %s76 = sphi 0, %s75
    %s92 = sphi 0, %s76
    %s96 = sphi 0, %s96
    %s98 = sphi 0, %s96
    %s99 = sphi 0, %s98
    %s113 = sphi 0, %s99
    %s119 = sphi 0, %s121
    %s122 = sphi 0, %s119
    %s123 = sphi 0, %s122
    %s139 = sphi 0, %s123
  $region4: #{caer_forward.1} parent=0 // loop_header_branch
    %13 = sbr.rel (%p11) target = $region8
  $region5: #{caer_forward.1} parent=0 // loop_body
    %s15 = ssub.s32 %s10, 1
    %s16 = ssub.s32 %s10, 2
    %s17 = sadd.s32 %s10, 1
    %s18 = ssub.s32 %s10, %s17
    %p19 = scmp.eq.s32.totalorder %s18, 0
    %s21 = sadd.s32 %s20, 1
    %s22 = scalar_select %p19, %s20, %s21
    %p25 = pneg %p19
    %p26 = scmp.eq.s32.totalorder %s10, 1
    %p27 = por %p25, %p26
    %p28 = scmp.ne.s32.totalorder %s20, %s23
    %p29 = scmp.eq.s32.totalorder %s10, 0
    %p30 = por %p28, %p29
    %p31 = scmp.ne.s32.totalorder %s20, %s23
    %p32 = scmp.eq.s32.totalorder %s15, 1
    %p33 = por %p31, %p32
    %p34 = scmp.ne.s32.totalorder %s23, %s24
    %p35 = scmp.eq.s32.totalorder %s15, 0
    %p36 = por %p34, %p35
    %p37 = scmp.ne.s32.totalorder %s23, %s24
    %p38 = scmp.eq.s32.totalorder %s16, 1
    %p39 = por %p37, %p38
    %p41 = scmp.ne.s32.totalorder %s24, %s40
    %p42 = scmp.eq.s32.totalorder %s16, 0
    %p43 = por %p41, %p42
    %s44 = ssub.s32 %s10, %s17
    %p45 = scmp.eq.s32.totalorder %s44, 0
    %s47 = sadd.s32 %s46, 1
    %s48 = scalar_select %p45, %s46, %s47
    %p51 = pneg %p45
    %p52 = scmp.eq.s32.totalorder %s10, 1
    %p53 = por %p51, %p52
    %p54 = scmp.ne.s32.totalorder %s46, %s49
    %p55 = scmp.eq.s32.totalorder %s10, 0
    %p56 = por %p54, %p55
    %p57 = scmp.ne.s32.totalorder %s46, %s49
    %p58 = scmp.eq.s32.totalorder %s15, 1
    %p59 = por %p57, %p58
    %p60 = scmp.ne.s32.totalorder %s49, %s50
    %p61 = scmp.eq.s32.totalorder %s15, 0
    %p62 = por %p60, %p61
    %p63 = scmp.ne.s32.totalorder %s49, %s50
    %p64 = scmp.eq.s32.totalorder %s16, 1
    %p65 = por %p63, %p64
    %p67 = scmp.ne.s32.totalorder %s50, %s66
    %p68 = scmp.eq.s32.totalorder %s16, 0
    %p69 = por %p67, %p68
    %s70 = ssub.s32 %s10, %s17
    %p71 = scmp.eq.s32.totalorder %s70, 0
    %s73 = sadd.s32 %s72, 1
    %s74 = scalar_select %p71, %s72, %s73
    %p77 = pneg %p71
    %p78 = scmp.eq.s32.totalorder %s10, 1
    %p79 = por %p77, %p78
    %p80 = scmp.ne.s32.totalorder %s72, %s75
    %p81 = scmp.eq.s32.totalorder %s10, 0
    %p82 = por %p80, %p81
    %p83 = scmp.ne.s32.totalorder %s72, %s75
    %p84 = scmp.eq.s32.totalorder %s15, 1
    %p85 = por %p83, %p84
    %p86 = scmp.ne.s32.totalorder %s75, %s76
    %p87 = scmp.eq.s32.totalorder %s15, 0
    %p88 = por %p86, %p87
    %p89 = scmp.ne.s32.totalorder %s75, %s76
    %p90 = scmp.eq.s32.totalorder %s16, 1
    %p91 = por %p89, %p90
    %p93 = scmp.ne.s32.totalorder %s76, %s92
    %p94 = scmp.eq.s32.totalorder %s16, 0
    %p95 = por %p93, %p94
    %s97 = sadd.s32 %s96, 1
    %p100 = scmp.eq.s32.totalorder %s10, 1
    %p101 = scmp.ne.s32.totalorder %s96, %s98
    %p102 = scmp.eq.s32.totalorder %s10, 0
    %p103 = por %p101, %p102
    %p104 = scmp.ne.s32.totalorder %s96, %s98
    %p105 = scmp.eq.s32.totalorder %s15, 1
    %p106 = por %p104, %p105
    %p107 = scmp.ne.s32.totalorder %s98, %s99
    %p108 = scmp.eq.s32.totalorder %s15, 0
    %p109 = por %p107, %p108
    %p110 = scmp.ne.s32.totalorder %s98, %s99
    %p111 = scmp.eq.s32.totalorder %s16, 1
    %p112 = por %p110, %p111
    %p114 = scmp.ne.s32.totalorder %s99, %s113
    %p115 = scmp.eq.s32.totalorder %s16, 0
    %p116 = por %p114, %p115
    %s117 = ssub.s32 %s10, %s17
    %p118 = scmp.eq.s32.totalorder %s117, 0
    %s120 = sadd.s32 %s119, 1
    %s121 = scalar_select %p118, %s119, %s120
    %p124 = pneg %p118
    %p125 = scmp.eq.s32.totalorder %s10, 1
    %p126 = por %p124, %p125
    %p127 = scmp.ne.s32.totalorder %s119, %s122
    %p128 = scmp.eq.s32.totalorder %s10, 0
    %p129 = por %p127, %p128
    %p130 = scmp.ne.s32.totalorder %s119, %s122
    %p131 = scmp.eq.s32.totalorder %s15, 1
    %p132 = por %p130, %p131
    %p133 = scmp.ne.s32.totalorder %s122, %s123
    %p134 = scmp.eq.s32.totalorder %s15, 0
    %p135 = por %p133, %p134
    %p136 = scmp.ne.s32.totalorder %s122, %s123
    %p137 = scmp.eq.s32.totalorder %s16, 1
    %p138 = por %p136, %p137
    %p140 = scmp.ne.s32.totalorder %s123, %s139
    %p141 = scmp.eq.s32.totalorder %s16, 0
    %p142 = por %p140, %p141
    %p143 = scmp.le.s32.totalorder 1, %s10
    %p144 = scmp.lt.s32.totalorder %s10, 3
    %p145 = pnand %p143, %p144
    %p146 = pneg %p145
    // Predicated region
    $region9: #{caer_forward.1} parent=5 // pred_check
      _
    $region10: #{caer_forward.1} parent=5 // pred_check_branch
      %148 = sbr.rel (%p145) target = $region12
    $region11: #{caer_forward.1} parent=5 // pred_region
      %s149 = ssub.s32 %s10, 1
      // Predicated region
      $region13: #{caer_forward.1} parent=11 // pred_check
        %p150 = pneg %p109
      $region14: #{caer_forward.1} parent=11 // pred_check_branch
        %152 = sbr.rel (%p150) target = $region16
      $region15: #{caer_forward.1} parent=11 // pred_region
        _
      $region16: #{caer_forward.1} parent=11 // pred_fallthru
        _
    $region12: #{caer_forward.1} parent=5 // pred_fallthru
      _
    %p153 = scmp.lt.s32.totalorder %s10, 2
    // Predicated region
    $region17: #{caer_forward.1} parent=5 // pred_check
      %p154 = pneg %p153
    $region18: #{caer_forward.1} parent=5 // pred_check_branch
      %156 = sbr.rel (%p154) target = $region20
    $region19: #{caer_forward.1} parent=5 // pred_region
      // Predicated region
      $region21: #{caer_forward.1} parent=19 // pred_check
        %p157 = pneg %p30
      $region22: #{caer_forward.1} parent=19 // pred_check_branch
        %159 = sbr.rel (%p157) target = $region24
      $region23: #{caer_forward.1} parent=19 // pred_region
        %p160 = scmp.lt.s32.totalorder %s10, 1
        %s161 = scalar_select %p160, %s10, 1
        %s162 = smul.addr %s161, 4
        %s163 = smul.addr %s162, 8
        %s164 = scalar_lea.vmem %s0, %s163
      $region24: #{caer_forward.1} parent=19 // pred_fallthru
        _
      // Predicated region
      $region25: #{caer_forward.1} parent=19 // pred_check
        %p165 = pneg %p56
      $region26: #{caer_forward.1} parent=19 // pred_check_branch
        %167 = sbr.rel (%p165) target = $region28
      $region27: #{caer_forward.1} parent=19 // pred_region
        %p168 = scmp.lt.s32.totalorder %s10, 1
        %s169 = scalar_select %p168, %s10, 1
        %s170 = smul.addr %s169, 8
        %s171 = scalar_lea.vmem %s1, %s170
      $region28: #{caer_forward.1} parent=19 // pred_fallthru
        _
      // Predicated region
      $region29: #{caer_forward.1} parent=19 // pred_check
        %p172 = pneg %p82
      $region30: #{caer_forward.1} parent=19 // pred_check_branch
        %174 = sbr.rel (%p172) target = $region32
      $region31: #{caer_forward.1} parent=19 // pred_region
        %p175 = scmp.lt.s32.totalorder %s10, 1
        %s176 = scalar_select %p175, %s10, 1
        %s177 = smul.addr %s176, 8
        %s178 = scalar_lea.vmem %s2, %s177
      $region32: #{caer_forward.1} parent=19 // pred_fallthru
        _
    $region20: #{caer_forward.1} parent=5 // pred_fallthru
      _
    %p179 = scmp.le.s32.totalorder 1, %s10
    %p180 = scmp.lt.s32.totalorder %s10, 3
    %p181 = pnand %p179, %p180
    %p182 = pneg %p181
    // Predicated region
    $region33: #{caer_forward.1} parent=5 // pred_check
      _
    $region34: #{caer_forward.1} parent=5 // pred_check_branch
      %184 = sbr.rel (%p181) target = $region36
    $region35: #{caer_forward.1} parent=5 // pred_region
      %s185 = ssub.s32 %s10, 1
      %p186 = scmp.lt.s32.totalorder %s15, 1
      %s187 = scalar_select %p186, %s15, 1
      %s188 = smul.addr %s187, 4
      %s189 = smul.addr %s188, 8
      %s190 = scalar_lea.vmem %s0, %s189
      %p191 = pneg %p36
      %p192 = pneg %p33
      %p193 = scmp.lt.s32.totalorder %s15, 1
      %s194 = scalar_select %p193, %s15, 1
      %s195 = smul.addr %s194, 8
      %s196 = scalar_lea.vmem %s1, %s195
      %p197 = pneg %p62
      %p198 = pneg %p59
      %p199 = scmp.lt.s32.totalorder %s15, 1
      %s200 = scalar_select %p199, %s15, 1
      %s201 = smul.addr %s200, 8
      %s202 = scalar_lea.vmem %s2, %s201
      %p203 = pneg %p88
      %p204 = pneg %p85
      %p205 = pneg %p109
      %p206 = pneg %p106
      %p207 = pneg %p135
      %p208 = pneg %p132
      %p209 = scmp.lt.s32.totalorder %s15, 1
      %s210 = scalar_select %p209, %s15, 1
      %s211 = smul.addr %s210, 4
      %s212 = smul.addr %s211, 8
      %s213 = scalar_lea.vmem %s4, %s212
      %p214 = scmp.lt.s32.totalorder %s15, 1
      %s215 = scalar_select %p214, %s15, 1
      %s216 = smul.addr %s215, 4
      %s217 = smul.addr %s216, 8
      %s218 = scalar_lea.vmem %s0, %s217
      %p219 = scmp.lt.s32.totalorder %s15, 1
      %s220 = scalar_select %p219, %s15, 1
      %s221 = smul.addr %s220, 8
      %s222 = scalar_lea.vmem %s1, %s221
      %p223 = scmp.lt.s32.totalorder %s15, 1
      %s224 = scalar_select %p223, %s15, 1
      %s225 = smul.addr %s224, 8
      %s226 = scalar_lea.vmem %s2, %s225
      %p227 = scmp.lt.s32.totalorder %s15, 1
      %s228 = scalar_select %p227, %s15, 1
      %s229 = smul.addr %s228, 4
      %s230 = smul.addr %s229, 8
      %s231 = scalar_lea.vmem %s4, %s230
      %v232 = vld [vmem:[%s218] sm:$0xff]
      %v233 = vld [vmem:[%s218 + $0x8] sm:$0xff]
      %v234 = vld [vmem:[%s218 + $0x10] sm:$0xff]
      %v235 = vld [vmem:[%s218 + $0x18] sm:$0xff]
      %v236 = vld [vmem:[%s222] sm:$0xff]
      %v237 = vld [vmem:[%s226] sm:$0xff]
      %v238 = vlaneseq
      %v239 = vand.u32 %v238, 127
      %240 = vset.pattern.permute.xlu0 0
      %241 = vperm.xlu0 %240, %v237
      %v242 = vpop.permute.xlu0 %241
      %vm243 = vcmp.lt.s32.totalorder %v239, %v242
      %vm244 = vcmp.gt.s32.totalorder %v237, 1
      %v245 = vsel %vm244, %v237, 1
      %v246 = vcvt.s32.f32 %v245
      %v247 = vsel %vm243, %v236, 0.0
      %vm248 = vcmask 130048
      %v249 = vsel %vm248, %v247, 0.0
      %250 = vadd.xlane.f32.xlu0 %v249
      %v251 = vpop.xlane.xlu0 %250
      %v252 = vrcp.pop %v246
      %v253 = vmul.f32 %v246, %v252
      %v254 = vsub.f32 1.0, %v253
      %v255 = vmul.f32 %v252, %v254
      %v256 = vadd.f32 %v252, %v255
      %vm257 = vweird.f32 %v246
      %vm258 = vweird.f32 %v252
      %vm259 = vmor %vm257, %vm258
      %v260 = vsel %vm259, %v252, %v256
      %v261 = vand.u32 2147483647, %v246
      %vm262 = vcmp.eq.f32.partialorder %v261, 8.507059e+37
      %v263 = vand.u32 %v246, 2147483648
      %v264 = vor.u32 1.1754944e-38, %v263
      %v265 = vsel %vm262, %v264, %v260
      %v266 = vmul.f32 %v251, %v265
      %268 = vset.pattern.permute.xlu0 0
      %269 = vperm.xlu0 %268, %v266
      %v270 = vpop.permute.xlu0 %269
      %vm272 = vcmp.ge.f32.partialorder %v236, %v270
      %vm273 = vmand %vm243, %vm272
      %v274 = vsel %vm273, 1.0, 0.0
      %v275 = vmul.f32 %v274, %v236
      %v276 = vld [vmem:[%s3] sm:$0xff]
      %v277 = vld [vmem:[%s3 + $0x8] sm:$0xff]
      %v278 = vld [vmem:[%s3 + $0x10] sm:$0xff]
      %v279 = vld [vmem:[%s3 + $0x18] sm:$0xff]
      %v280 = vld [vmem:[%s3 + $0x20] sm:$0xff]
      %v281 = vld [vmem:[%s3 + $0x28] sm:$0xff]
      %v282 = vld [vmem:[%s3 + $0x30] sm:$0xff]
      %v283 = vld [vmem:[%s3 + $0x38] sm:$0xff]
      %v285 = vsel %vm248, %v275, 0
      %287 = vmatpush.msra.mxu0 0.0
      %288 = vmatpush.msra.mxu0 0.0
      %289 = vmatpush.msra.mxu0 0.0
      %290 = vmatpush.msra.mxu0 0.0
      %291 = vmatpush.msra.mxu0 0.0
      %292 = vmatpush.msra.mxu0 0.0
      %293 = vmatpush.msra.mxu0 0.0
      %294 = vmatpush.msra.mxu0 0.0
      %295 = vmatpush.msra.mxu0 0.0
      %296 = vmatpush.msra.mxu0 0.0
      %297 = vmatpush.msra.mxu0 0.0
      %298 = vmatpush.msra.mxu0 0.0
      %299 = vmatpush.msra.mxu0 0.0
      %300 = vmatpush.msra.mxu0 0.0
      %301 = vmatpush.msra.mxu0 %v280
      %302 = vmatpush.msra.mxu0 %v276
      %303 = vmatmul.f32.gmra.mxu0 %v285
      %v304 = vpop.f32.mrf.mxu0
      %v305 = vadd.f32 0.0, %v304
      %306 = vdwg.mxu0
      %307 = vmatpush.msra.mxu0 0.0
      %308 = vmatpush.msra.mxu0 0.0
      %309 = vmatpush.msra.mxu0 0.0
      %310 = vmatpush.msra.mxu0 0.0
      %311 = vmatpush.msra.mxu0 0.0
      %312 = vmatpush.msra.mxu0 0.0
      %313 = vmatpush.msra.mxu0 0.0
      %314 = vmatpush.msra.mxu0 0.0
      %315 = vmatpush.msra.mxu0 0.0
      %316 = vmatpush.msra.mxu0 0.0
      %317 = vmatpush.msra.mxu0 0.0
      %318 = vmatpush.msra.mxu0 0.0
      %319 = vmatpush.msra.mxu0 0.0
      %320 = vmatpush.msra.mxu0 0.0
      %321 = vmatpush.msra.mxu0 %v281
      %322 = vmatpush.msra.mxu0 %v277
      %323 = vmatmul.f32.gmra.mxu0 %v285
      %v324 = vpop.f32.mrf.mxu0
      %v325 = vadd.f32 0.0, %v324
      %326 = vdwg.mxu0
      %327 = vmatpush.msra.mxu0 0.0
      %328 = vmatpush.msra.mxu0 0.0
      %329 = vmatpush.msra.mxu0 0.0
      %330 = vmatpush.msra.mxu0 0.0
      %331 = vmatpush.msra.mxu0 0.0
      %332 = vmatpush.msra.mxu0 0.0
      %333 = vmatpush.msra.mxu0 0.0
      %334 = vmatpush.msra.mxu0 0.0
      %335 = vmatpush.msra.mxu0 0.0
      %336 = vmatpush.msra.mxu0 0.0
      %337 = vmatpush.msra.mxu0 0.0
      %338 = vmatpush.msra.mxu0 0.0
      %339 = vmatpush.msra.mxu0 0.0
      %340 = vmatpush.msra.mxu0 0.0
      %341 = vmatpush.msra.mxu0 %v282
      %342 = vmatpush.msra.mxu0 %v278
      %343 = vmatmul.f32.gmra.mxu0 %v285
      %v344 = vpop.f32.mrf.mxu0
      %v345 = vadd.f32 0.0, %v344
      %346 = vdwg.mxu0
      %347 = vmatpush.msra.mxu0 0.0
      %348 = vmatpush.msra.mxu0 0.0
      %349 = vmatpush.msra.mxu0 0.0
      %350 = vmatpush.msra.mxu0 0.0
      %351 = vmatpush.msra.mxu0 0.0
      %352 = vmatpush.msra.mxu0 0.0
      %353 = vmatpush.msra.mxu0 0.0
      %354 = vmatpush.msra.mxu0 0.0
      %355 = vmatpush.msra.mxu0 0.0
      %356 = vmatpush.msra.mxu0 0.0
      %357 = vmatpush.msra.mxu0 0.0
      %358 = vmatpush.msra.mxu0 0.0
      %359 = vmatpush.msra.mxu0 0.0
      %360 = vmatpush.msra.mxu0 0.0
      %361 = vmatpush.msra.mxu0 %v283
      %362 = vmatpush.msra.mxu0 %v279
      %363 = vmatmul.f32.gmra.mxu0 %v285
      %v364 = vpop.f32.mrf.mxu0
      %v365 = vadd.f32 0.0, %v364
      %366 = vdwg.mxu0
      %v367 = vmul.f32 %v232, %v305
      %v368 = vmul.f32 %v233, %v325
      %v369 = vmul.f32 %v234, %v345
      %v370 = vmul.f32 %v235, %v365
      %371 = vst [vmem:[%s231] sm:$0xff] %v367
      %372 = vst [vmem:[%s231 + $0x8] sm:$0xff] %v368
      %373 = vst [vmem:[%s231 + $0x10] sm:$0xff] %v369
      %374 = vst [vmem:[%s231 + $0x18] sm:$0xff] %v370
      %p375 = scmp.lt.s32.totalorder %s15, 1
      %s376 = scalar_select %p375, %s15, 1
      %s377 = smul.addr %s376, 4
      %s378 = smul.addr %s377, 8
      %s379 = scalar_lea.vmem %s4, %s378
      // Predicated region
      $region37: #{caer_forward.1} parent=35 // pred_check
        %p380 = pneg %p132
      $region38: #{caer_forward.1} parent=35 // pred_check_branch
        %382 = sbr.rel (%p380) target = $region40
      $region39: #{caer_forward.1} parent=35 // pred_region
        _
      $region40: #{caer_forward.1} parent=35 // pred_fallthru
        _
    $region36: #{caer_forward.1} parent=5 // pred_fallthru
      _
    %p383 = scmp.le.s32.totalorder 2, %s10
    // Predicated region
    $region41: #{caer_forward.1} parent=5 // pred_check
      %p384 = pneg %p383
    $region42: #{caer_forward.1} parent=5 // pred_check_branch
      %386 = sbr.rel (%p384) target = $region44
    $region43: #{caer_forward.1} parent=5 // pred_region
      %s387 = ssub.s32 %s10, 2
      // Predicated region
      $region45: #{caer_forward.1} parent=43 // pred_check
        %p388 = pneg %p138
      $region46: #{caer_forward.1} parent=43 // pred_check_branch
        %390 = sbr.rel (%p388) target = $region48
      $region47: #{caer_forward.1} parent=43 // pred_region
        %p391 = scmp.lt.s32.totalorder %s16, 1
        %s392 = scalar_select %p391, %s16, 1
        %s393 = smul.addr %s392, 4
        %s394 = smul.addr %s393, 8
        %s395 = scalar_lea.vmem %s4, %s394
      $region48: #{caer_forward.1} parent=43 // pred_fallthru
        _
    $region44: #{caer_forward.1} parent=5 // pred_fallthru
      _
  $region6: #{caer_forward.1} parent=0 // loop_footer
    %s14 = sadd.s32 1, %s10
  $region7: #{caer_forward.1} parent=0 // loop_footer_branch
    %9 = sbr.rel target = $region3
  $region8: #{caer_forward.1} parent=0 // loop_exit
    _

</llo_original>
